<compile_context>
chip_gen: v7x
topology: tpu7x:2x2x1
jax: 0.10.0
libtpu: 0.0.40
codegen_flags: <defaults>
</compile_context>

<pallas_src>
import jax
import jax.numpy as jnp
import numpy as np
from jax.experimental import pallas as pl
from jax.experimental.pallas import tpu as pltpu

INPUT_SIZE = 20
OUTPUT_SIZE = 4
N_HIDDEN = 3          # fixed number of installed cascade neurons for this synthetic forward
BATCH = 16            # small demo batch -> single block, grid=(1,)


# ----------------------------------------------------------------------------
# Kernel: transposed matmul + bias + sigmoid, batch on the lane axis.
#   x_ref : (TB, IN)   bf16/f32
#   wt_ref: (OUT, IN)  bf16/f32   (folded weight, transposed)
#   bt_ref: (OUT, 1)   f32        (folded bias, transposed)
#   out_ref:(OUT, TB)  f32        (lane-dense: TB on lanes)
# ----------------------------------------------------------------------------
def casper_kernel(x_ref, wt_ref, bt_ref, out_ref):
    logic_t = jax.lax.dot_general(
        wt_ref[...], x_ref[...],
        dimension_numbers=(((1,), (1,)), ((), ())),       # contract over IN
        preferred_element_type=jnp.float32)               # (OUT, TB), f32 acc
    out_ref[...] = jax.nn.sigmoid(logic_t + bt_ref[...]).astype(out_ref.dtype)


def casper_forward(x, w_eff, b_eff, *, tb=512, use_bf16=True):
    """x: (B, IN) f32, w_eff: (IN, OUT), b_eff: (1, OUT). Returns (B, OUT) f32."""
    B, IN = x.shape
    OUT = w_eff.shape[1]

    if B <= tb:
        tb_eff, b_pad = B, B                 # single block: no per-step overhead
    else:
        assert tb % 128 == 0, "batch tile must be lane-dense (multiple of 128)"
        tb_eff = tb
        b_pad = int(pl.cdiv(B, tb_eff)) * tb_eff
    if b_pad != B:
        x = jnp.pad(x, ((0, b_pad - B), (0, 0)))          # masked-tail via padding
    grid = (b_pad // tb_eff,)

    op_dtype = jnp.bfloat16 if use_bf16 else jnp.float32
    x_in = x.astype(op_dtype)                 # bf16 copy in HBM -> half the traffic
    wt = w_eff.T.astype(op_dtype)             # (OUT, IN), tiny
    bt = b_eff.T.astype(jnp.float32)          # (OUT, 1)

    out_t = pl.pallas_call(
        casper_kernel,
        out_shape=jax.ShapeDtypeStruct((OUT, b_pad), jnp.float32),
        grid=grid,
        in_specs=[
            pl.BlockSpec((tb_eff, IN), lambda i: (i, 0)),   # x batch tile
            pl.BlockSpec((OUT, IN), lambda i: (0, 0)),      # folded weight (replicated)
            pl.BlockSpec((OUT, 1), lambda i: (0, 0)),       # folded bias  (replicated)
        ],
        out_specs=pl.BlockSpec((OUT, tb_eff), lambda i: (0, i)),   # lane-dense output
        compiler_params=pltpu.CompilerParams(
            dimension_semantics=("parallel",)),             # batch tiles across TCs
    )(x_in, wt, bt)

    return out_t.T[:B]                                      # (B, OUT)


# ----------------------------------------------------------------------------
# Host-side fold of the cascade into a single effective affine map.
#   neuron_i = x @ v_i + c_i  (built recursively),
#   logic    = x @ (W_io + V @ W_out) + (b_io + c @ W_out)
# ----------------------------------------------------------------------------
def fold_casper_weights(w_io, b_io, hid_ws, hid_bs, out_ws):
    IN = w_io.shape[0]
    vs, cs = [], []
    for i in range(len(hid_ws)):
        w = hid_ws[i][:, 0]                 # (IN + i,)
        b = hid_bs[i][0, 0]                 # scalar
        v = w[:IN]
        c = b
        for j in range(i):                  # feed previously installed neurons
            v = v + w[IN + j] * vs[j]
            c = c + w[IN + j] * cs[j]
        vs.append(v)
        cs.append(c)
    if vs:
        V = jnp.stack(vs, axis=1)                       # (IN, H)
        c = jnp.stack(cs).reshape(1, -1)                # (1, H)
        W_out = jnp.concatenate(out_ws, axis=0)         # (H, OUT)
        w_eff = w_io + V @ W_out
        b_eff = b_io + c @ W_out
    else:
        w_eff, b_eff = w_io, b_io
    return w_eff, b_eff


# ----------------------------------------------------------------------------
# Pure-JAX replica of the (unfolded) PyTorch forward, for verification.
# ----------------------------------------------------------------------------
def reference_forward(x, w_io, b_io, hid_ws, hid_bs, out_ws):
    neurons_all = x
    for i in range(len(hid_ws)):
        neuron = neurons_all[:, :INPUT_SIZE + i] @ hid_ws[i] + hid_bs[i]  # (B, 1)
        neurons_all = jnp.concatenate([neurons_all, neuron], axis=1)
    logic = x @ w_io + b_io
    for i in range(len(out_ws)):
        logic = logic + neurons_all[:, INPUT_SIZE + i:INPUT_SIZE + i + 1] @ out_ws[i]
    return jax.nn.sigmoid(logic)


if __name__ == "__main__":
    key = jax.random.PRNGKey(0)
    keys = jax.random.split(key, 5 + 3 * N_HIDDEN)

    # Input (batch, input_size)
    x = jax.random.normal(keys[0], (BATCH, INPUT_SIZE), dtype=jnp.float32)

    # input_to_output: nn.Linear(20, 4) — stored already transposed (IN, OUT)
    w_io = (jax.random.normal(keys[1], (INPUT_SIZE, OUTPUT_SIZE), jnp.float32)
            * (1.0 / np.sqrt(INPUT_SIZE)))
    b_io = (jax.random.normal(keys[2], (1, OUTPUT_SIZE), jnp.float32)
            * (1.0 / np.sqrt(INPUT_SIZE)))

    # Cascade hidden units: all_to_hidden[i] = nn.Linear(input_size + i, 1)
    hid_ws, hid_bs = [], []
    for i in range(N_HIDDEN):
        fan_in = INPUT_SIZE + i
        hid_ws.append(jax.random.normal(keys[3 + 2 * i], (fan_in, 1), jnp.float32)
                      * (1.0 / np.sqrt(fan_in)))
        hid_bs.append(jax.random.normal(keys[4 + 2 * i], (1, 1), jnp.float32)
                      * (1.0 / np.sqrt(fan_in)))

    # all_to_output[i] = nn.Linear(1, 4, bias=False) -> weight vector (1, OUT)
    out_ws = []
    for i in range(N_HIDDEN):
        out_ws.append(jax.random.normal(keys[3 + 2 * N_HIDDEN + i],
                                        (1, OUTPUT_SIZE), jnp.float32))

    # Fold the fixed cascade + output head into a single effective affine map.
    w_eff, b_eff = fold_casper_weights(w_io, b_io, hid_ws, hid_bs, out_ws)
    ref = reference_forward(x, w_io, b_io, hid_ws, hid_bs, out_ws)

    # f32 path: strict check against the unfolded reference.
    out_f32 = jax.block_until_ready(casper_forward(x, w_eff, b_eff, use_bf16=False))
    np.testing.assert_allclose(np.asarray(out_f32), np.asarray(ref),
                               rtol=1e-5, atol=1e-5)

    # bf16-operand path (default): looser tolerance (sigmoid output in [0,1]).
    out_bf16 = jax.block_until_ready(casper_forward(x, w_eff, b_eff, use_bf16=True))
    np.testing.assert_allclose(np.asarray(out_bf16), np.asarray(ref),
                               rtol=2e-2, atol=2e-2)

    # Larger, non-tile-multiple batch: exercises multi-step grid + padding path.
    B2 = 600
    x2 = jax.random.normal(keys[-1], (B2, INPUT_SIZE), dtype=jnp.float32)
    ref2 = reference_forward(x2, w_io, b_io, hid_ws, hid_bs, out_ws)
    out2_f32 = jax.block_until_ready(
        casper_forward(x2, w_eff, b_eff, tb=256, use_bf16=False))
    np.testing.assert_allclose(np.asarray(out2_f32), np.asarray(ref2),
                               rtol=1e-5, atol=1e-5)
    out2_bf16 = jax.block_until_ready(
        casper_forward(x2, w_eff, b_eff, tb=256, use_bf16=True))
    np.testing.assert_allclose(np.asarray(out2_bf16), np.asarray(ref2),
                               rtol=2e-2, atol=2e-2)

    print("KERNEL_OK")
</pallas_src>

<mosaic_0001>
module attributes {stable_mosaic.version = 11 : i64} {
  func.func @casper_kernel(%arg0: i32, %arg1: memref<16x20xf32, #tpu.memory_space<vmem>>, %arg2: memref<4x20xf32, #tpu.memory_space<vmem>>, %arg3: memref<4x1xf32, #tpu.memory_space<vmem>>, %arg4: memref<4x16xf32, #tpu.memory_space<vmem>>) attributes {dimension_semantics = [#tpu.dimension_semantics<parallel>], iteration_bounds = array<i64: 1>, scalar_prefetch = 0 : i64, scratch_operands = 0 : i64, tpu.core_type = #tpu.core_type<tc>, window_params = [{transform_indices = @transform_0, window_bounds = array<i64: 16, 20>}, {pipeline_mode = #tpu.pipeline_mode<synchronous>, transform_indices = @transform_1, window_bounds = array<i64: 4, 20>}, {pipeline_mode = #tpu.pipeline_mode<synchronous>, transform_indices = @transform_2, window_bounds = array<i64: 4, 1>}, {transform_indices = @transform_3, window_bounds = array<i64: 4, 16>}]} {
    %c0 = arith.constant 0 : index
    %c0_0 = arith.constant 0 : index
    %0 = vector.load %arg2[%c0, %c0_0] : memref<4x20xf32, #tpu.memory_space<vmem>>, vector<4x20xf32>
    %c0_1 = arith.constant 0 : index
    %c0_2 = arith.constant 0 : index
    %1 = vector.load %arg1[%c0_1, %c0_2] : memref<16x20xf32, #tpu.memory_space<vmem>>, vector<16x20xf32>
    %cst = arith.constant dense<0.000000e+00> : vector<4x16xf32>
    %2 = tpu.matmul %0, %1, %cst {dimension_numbers = #tpu.dot_dimension_numbers<[1], [1], [0], [0], [0, 0, 1, 0], [], []>} : vector<4x20xf32>, vector<16x20xf32>, vector<4x16xf32> -> vector<4x16xf32>
    %c0_3 = arith.constant 0 : index
    %c0_4 = arith.constant 0 : index
    %3 = vector.load %arg3[%c0_3, %c0_4] : memref<4x1xf32, #tpu.memory_space<vmem>>, vector<4x1xf32>
    %4 = vector.broadcast %3 : vector<4x1xf32> to vector<4x16xf32>
    %5 = arith.addf %2, %4 : vector<4x16xf32>
    %6 = arith.negf %5 : vector<4x16xf32>
    %7 = math.exp %6 : vector<4x16xf32>
    %cst_5 = arith.constant 1.000000e+00 : f32
    %8 = vector.broadcast %cst_5 : f32 to vector<4x16xf32>
    %9 = arith.addf %8, %7 : vector<4x16xf32>
    %10 = arith.divf %8, %9 : vector<4x16xf32>
    %c0_6 = arith.constant 0 : index
    %c0_7 = arith.constant 0 : index
    %11 = vector.load %arg4[%c0_6, %c0_7] : memref<4x16xf32, #tpu.memory_space<vmem>>, vector<4x16xf32>
    tpu.vector_store %arg4[%c0_6, %c0_7], %10 {strides = array<i32>} : memref<4x16xf32, #tpu.memory_space<vmem>>, vector<4x16xf32>,
    return
  }
  func.func @transform_0(%arg0: i32) -> (i32, i32) {
    %c0_i32 = arith.constant 0 : i32
    %c0_i32_0 = arith.constant 0 : i32
    return %arg0, %c0_i32 : i32, i32
  }
  func.func @transform_1(%arg0: i32) -> (i32, i32) {
    %c0_i32 = arith.constant 0 : i32
    %c0_i32_0 = arith.constant 0 : i32
    %c0_i32_1 = arith.constant 0 : i32
    return %c0_i32, %c0_i32_0 : i32, i32
  }
  func.func @transform_2(%arg0: i32) -> (i32, i32) {
    %c0_i32 = arith.constant 0 : i32
    %c0_i32_0 = arith.constant 0 : i32
    %c0_i32_1 = arith.constant 0 : i32
    return %c0_i32, %c0_i32_0 : i32, i32
  }
  func.func @transform_3(%arg0: i32) -> (i32, i32) {
    %c0_i32 = arith.constant 0 : i32
    %c0_i32_0 = arith.constant 0 : i32
    return %c0_i32, %arg0 : i32, i32
  }
}

</mosaic_0001>

<llo_original>
// kernel: tpu_custom_call.1
$region0: #{tpu_custom_call.1}
  #allocation0 [shape = 'u32[]', space=smem, size = 0x4, offset = 0x4, fixed_abs, tag = 'smem constant byte address 0x4 - core index']
  #allocation1 [shape = 'u32[144,128]{1,0:T(1,128)}', space=vmem, size = 0x12000, scoped, tag = 'internal scratch']
  %s0 = inlined_call_operand.hbm [shape: f32[16,20], index: 0, kind: input, shape index: {}]
  %s1 = inlined_call_operand.vmem [shape: f32[4,20], index: 1, kind: input, shape index: {}]
  %s2 = inlined_call_operand.vmem [shape: f32[4,1], index: 2, kind: input, shape index: {}]
  %s3 = inlined_call_operand.hbm [shape: f32[4,16], index: 3, kind: output, shape index: {}]
  %s4 = sld [smem:[#allocation0]]
  $region26: #{tpu_custom_call.1} parent=0
    _
  %s6 = ssub.s32 1, %s4
  %s7 = scalar_select 0, %s6, %s4
  $region1: #{tpu_custom_call.1} parent=0
    #allocation2 [shape = 'u8[8192]{0}', space=vmem, size = 0x2000, scoped, tag = 'input window, operand 0, single buffered']
    #allocation3 [shape = 's32[1]{0}', space=sflag, size = 0x4, scoped, tag = 'scoped memory for tpu_custom_call.1']
    #allocation4 [shape = 's32[1]{0}', space=sflag, size = 0x4, scoped, tag = 'scoped memory for tpu_custom_call.1']
    #allocation5 [shape = 'u8[2048]{0}', space=vmem, size = 0x800, scoped, tag = 'output window, operand 0, single buffered']
    %8 = vsyncpa [#allocation3], 0
    %9 = vsyncpa [#allocation4], 0
    // Predicated region
    $region2: #{tpu_custom_call.1} parent=1 // pred_check
      _
    $region3: #{tpu_custom_call.1} parent=1 // pred_check_branch
      %11 = sbr.rel (0) target = $region5
    $region4: #{tpu_custom_call.1} parent=1 // pred_region
      %s13 = ssub.s32 256, 256
      %14 = vsyncadd [#allocation3], %s13
      %s15 = sshll.u32 [#allocation2], 4
      %s16 = int_to_ptr.vmem [resolvable:$true] %s15
      %21 = dma.hbm_to_vmem [thread:$0]  %s0, 256, %s16, [#allocation3], 128, 128, 8
    $region5: #{tpu_custom_call.1} parent=1 // pred_fallthru
      _
    // Predicated region
    $region6: #{tpu_custom_call.1} parent=1 // pred_check
      _
    $region7: #{tpu_custom_call.1} parent=1 // pred_check_branch
      %23 = sbr.rel (0) target = $region9
    $region8: #{tpu_custom_call.1} parent=1 // pred_region
      _
    $region9: #{tpu_custom_call.1} parent=1 // pred_fallthru
      _
    // Predicated region
    $region10: #{tpu_custom_call.1} parent=1 // pred_check
      _
    $region11: #{tpu_custom_call.1} parent=1 // pred_check_branch
      %25 = sbr.rel (0) target = $region13
    $region12: #{tpu_custom_call.1} parent=1 // pred_region
      _
    $region13: #{tpu_custom_call.1} parent=1 // pred_fallthru
      _
    // Predicated region
    $region14: #{tpu_custom_call.1} parent=1 // pred_check
      _
    $region15: #{tpu_custom_call.1} parent=1 // pred_check_branch
      %27 = sbr.rel (0) target = $region17
    $region16: #{tpu_custom_call.1} parent=1 // pred_region
      %28 = dma.done [#allocation3], 256
    $region17: #{tpu_custom_call.1} parent=1 // pred_fallthru
      _
    %v29 = vld [vmem:[%s1] sm:$0xf]
    %v30 = vld [vmem:[#allocation2] sm:$0xff]
    %v31 = vld [vmem:[#allocation2 + $0x8] sm:$0xff]
    %v32 = vld [vmem:[%s2] sm:$0xf]
    %34 = vset.pattern.permute.xlu0 0
    %35 = vperm.xlu0 %34, %v32
    %v36 = vpop.permute.xlu0 %35
    %vm38 = vcmask 162816
    %v40 = vsel %vm38, %v29, 0
    %v43 = vsel %vm38, %v30, 0
    %v46 = vsel %vm38, %v31, 0
    %48 = vmatprep.subr.mxu0 0.0
    %49 = vmatpush1.xpose.msra.mxu0 %v43
    %50 = vmatprep.subr.mxu0 0.0
    %51 = vmatpush1.xpose.msra.mxu0 %v46
    %52 = vmatprep.subr.mxu0 0.0
    %53 = vmatpush1.xpose.msra.mxu0 0.0
    %54 = vmatprep.subr.mxu0 0.0
    %55 = vmatpush1.xpose.msra.mxu0 0.0
    %56 = vmatprep.subr.mxu0 0.0
    %57 = vmatpush1.xpose.msra.mxu0 0.0
    %58 = vmatprep.subr.mxu0 0.0
    %59 = vmatpush1.xpose.msra.mxu0 0.0
    %60 = vmatprep.subr.mxu0 0.0
    %61 = vmatpush1.xpose.msra.mxu0 0.0
    %62 = vmatprep.subr.mxu0 0.0
    %63 = vmatpush1.xpose.msra.mxu0 0.0
    %64 = vmatprep.subr.mxu0 0.0
    %65 = vmatpush1.xpose.msra.mxu0 0.0
    %66 = vmatprep.subr.mxu0 0.0
    %67 = vmatpush1.xpose.msra.mxu0 0.0
    %68 = vmatprep.subr.mxu0 0.0
    %69 = vmatpush1.xpose.msra.mxu0 0.0
    %70 = vmatprep.subr.mxu0 0.0
    %71 = vmatpush1.xpose.msra.mxu0 0.0
    %72 = vmatprep.subr.mxu0 0.0
    %73 = vmatpush1.xpose.msra.mxu0 0.0
    %74 = vmatprep.subr.mxu0 0.0
    %75 = vmatpush1.xpose.msra.mxu0 0.0
    %76 = vmatprep.subr.mxu0 0.0
    %77 = vmatpush1.xpose.msra.mxu0 0.0
    %78 = vmatprep.subr.mxu0 0.0
    %79 = vmatpush1.xpose.msra.mxu0 0.0
    %80 = vmatprep.subr.mxu0 0.0
    %81 = vmatpush1.xpose.msra.mxu0 0.0
    %82 = vmatprep.subr.mxu0 0.0
    %83 = vmatpush1.xpose.msra.mxu0 0.0
    %84 = vmatprep.subr.mxu0 0.0
    %85 = vmatpush1.xpose.msra.mxu0 0.0
    %86 = vmatprep.subr.mxu0 0.0
    %87 = vmatpush1.xpose.msra.mxu0 0.0
    %88 = vmatprep.subr.mxu0 0.0
    %89 = vmatpush1.xpose.msra.mxu0 0.0
    %90 = vmatprep.subr.mxu0 0.0
    %91 = vmatpush1.xpose.msra.mxu0 0.0
    %92 = vmatprep.subr.mxu0 0.0
    %93 = vmatpush1.xpose.msra.mxu0 0.0
    %94 = vmatprep.subr.mxu0 0.0
    %95 = vmatpush1.xpose.msra.mxu0 0.0
    %96 = vmatprep.subr.mxu0 0.0
    %97 = vmatpush1.xpose.msra.mxu0 0.0
    %98 = vmatprep.subr.mxu0 0.0
    %99 = vmatpush1.xpose.msra.mxu0 0.0
    %100 = vmatprep.subr.mxu0 0.0
    %101 = vmatpush1.xpose.msra.mxu0 0.0
    %102 = vmatprep.subr.mxu0 0.0
    %103 = vmatpush1.xpose.msra.mxu0 0.0
    %104 = vmatprep.subr.mxu0 0.0
    %105 = vmatpush1.xpose.msra.mxu0 0.0
    %106 = vmatprep.subr.mxu0 0.0
    %107 = vmatpush1.xpose.msra.mxu0 0.0
    %108 = vmatprep.subr.mxu0 0.0
    %109 = vmatpush1.xpose.msra.mxu0 0.0
    %110 = vmatprep.subr.mxu0 0.0
    %111 = vmatpush1.xpose.msra.mxu0 0.0
    %112 = vmatprep.mubr.f32.mxu0 0.0
    %113 = vmatmul.mubr.f32.gmra.mrb[0].mxu0 %v40
    %v114 = vpop.f32.mrb[0].mxu0
    %v115 = vadd.f32 %v36, %v114
    %v116 = vpop.f32.mrb[0].mxu0
    %117 = vdwg.mxu0
    %v118 = vxor.u32 %v115, 2147483648
    %v119 = vmul.f32 %v118, 1.442695
    %v120 = vpow.pop %v119
    %v121 = vadd.f32 %v120, 1.0
    %v122 = vrcp.pop %v121
    %v123 = vmul.f32 1.0, %v122
    %vm124 = vcmask 125952
    %125 = vst.msk [vmem:[#allocation5] sm:$0xf] %vm124, %v123
    // Predicated region
    $region18: #{tpu_custom_call.1} parent=1 // pred_check
      _
    $region19: #{tpu_custom_call.1} parent=1 // pred_check_branch
      %127 = sbr.rel (0) target = $region21
    $region20: #{tpu_custom_call.1} parent=1 // pred_region
      %s129 = ssub.s32 64, 64
      %130 = vsyncadd [#allocation4], %s129
      %s132 = sshll.u32 [#allocation5], 4
      %s133 = int_to_ptr.vmem [resolvable:$true] %s132
      %135 = dma.vmem_to_hbm [thread:$0]  %s133, 64, %s3, [#allocation4]
    $region21: #{tpu_custom_call.1} parent=1 // pred_fallthru
      _
    // Predicated region
    $region22: #{tpu_custom_call.1} parent=1 // pred_check
      _
    $region23: #{tpu_custom_call.1} parent=1 // pred_check_branch
      %137 = sbr.rel (0) target = $region25
    $region24: #{tpu_custom_call.1} parent=1 // pred_region
      %138 = dma.done [#allocation4], 64
    $region25: #{tpu_custom_call.1} parent=1 // pred_fallthru
      _
    %139 = vsyncpa [#allocation3], 1
    %140 = vsyncpa [#allocation4], 1

</llo_original>
